<compile_context>
chip_gen: v5e
topology: v5e:2x2
jax: 0.10.0
libtpu: 0.0.40
codegen_flags: <defaults>
</compile_context>

<pallas_src>
import jax
import jax.numpy as jnp
from jax import lax
from jax.experimental import pallas as pl
from jax.experimental.pallas import tpu as pltpu


def _round_up(x: int, m: int) -> int:
    return (x + m - 1) // m * m


def _pick_tile(dim: int, max_tile: int, align: int):
    """Pick a tile (multiple of `align`, <= max_tile) minimizing padding; prefer
    larger tiles on ties. Returns (tile, padded_dim)."""
    best_t, best_pad = None, None
    t = align
    while t <= max_tile:
        padded = _round_up(dim, t)
        if best_pad is None or padded < best_pad or (padded == best_pad and t > best_t):
            best_t, best_pad = t, padded
        t += align
    return best_t, best_pad


def _tpu_defaults():
    """(tm, tn, tk, vmem_capacity_bytes) tuned per chip generation."""
    try:
        cap = int(pltpu.get_tpu_info().vmem_capacity_bytes)
    except Exception:
        cap = 64 << 20  # conservative: v7x per-TC VMEM
    if cap >= (100 << 20):        # v5e / v6e: 128 MiB VMEM
        return 1024, 1024, 512, cap
    return 768, 768, 512, cap     # v7x: 64 MiB per TC


def _linear_relu_kernel_single_k(x_ref, w_ref, b_ref, o_ref):
    # x_ref: (tm, K) bf16   w_ref: (tn, K) bf16 (native nn.Linear layout)
    # b_ref: (1, tn) f32    o_ref: (tm, tn) out dtype
    acc = lax.dot_general(
        x_ref[...], w_ref[...],
        dimension_numbers=(((1,), (1,)), ((), ())),
        preferred_element_type=jnp.float32,
    )
    o_ref[...] = jnp.maximum(acc + b_ref[...], 0.0).astype(o_ref.dtype)


def _linear_relu_kernel_acc(x_ref, w_ref, b_ref, o_ref, acc_ref):
    # Same layouts as above plus acc_ref: (tm, tn) f32 scratch resident over K.
    k = pl.program_id(2)

    @pl.when(k == 0)
    def _init():
        acc_ref[...] = jnp.zeros_like(acc_ref)

    acc_ref[...] += lax.dot_general(
        x_ref[...], w_ref[...],
        dimension_numbers=(((1,), (1,)), ((), ())),
        preferred_element_type=jnp.float32,
    )

    @pl.when(k == pl.num_programs(2) - 1)
    def _epilogue():
        # Bias add + ReLU in f32 (VPU), cast once on the way out.
        o_ref[...] = jnp.maximum(acc_ref[...] + b_ref[...], 0.0).astype(o_ref.dtype)


def linear_relu(x, w, b=None, *, tm=None, tn=None, tk=None,
                compute_dtype=jnp.bfloat16):
    """relu(x @ w.T + b).

    x: [..., dim_in], w: [dim_hidden, dim_in] (PyTorch nn.Linear layout),
    b: [dim_hidden] or None.
    """
    orig_shape = x.shape
    if x.ndim != 2:
        x = x.reshape(-1, orig_shape[-1])
    B, K = x.shape
    N, Kw = w.shape
    assert K == Kw, "dim_in mismatch between x and w"
    out_dtype = x.dtype

    tm_d, tn_d, tk_d, vmem_cap = _tpu_defaults()
    tm_d = tm or tm_d
    tn_d = tn or tn_d
    tk_d = tk or tk_d

    # M: sublane dim of x/out -> single full-dim tile if it fits, else 16-aligned.
    if B <= tm_d:
        tm_, Mp = B, B
    else:
        tm_, Mp = _pick_tile(B, tm_d, 16)
    # N: lane dim of out (sublane of w) -> full-dim tile if it fits, else 128-aligned.
    if N <= tn_d:
        tn_, Np = N, N
    else:
        tn_, Np = _pick_tile(N, tn_d, 128)
    # K: lane dim of x and w -> full-dim tile if it fits, else 128-aligned.
    if K <= tk_d:
        tk_, Kp = K, K
    else:
        tk_, Kp = _pick_tile(K, tk_d, 128)

    # Cast once; pad only when actually misaligned (zero-padded K rows/cols
    # contribute nothing; padded M/N rows/cols are sliced off at the end).
    xc = x.astype(compute_dtype)
    if (Mp, Kp) != (B, K):
        xc = jnp.pad(xc, ((0, Mp - B), (0, Kp - K)))

    wc = w.astype(compute_dtype)  # keep native (N, K) layout -- no transpose
    if (Np, Kp) != (N, K):
        wc = jnp.pad(wc, ((0, Np - N), (0, Kp - K)))

    if b is None:
        bc = jnp.zeros((1, Np), jnp.float32)
    else:
        bc = b.astype(jnp.float32).reshape(1, N)
        if Np != N:
            bc = jnp.pad(bc, ((0, 0), (0, Np - N)))

    n_k = Kp // tk_
    single_k = n_k == 1

    in_isz = jnp.dtype(compute_dtype).itemsize
    out_isz = jnp.dtype(out_dtype).itemsize
    vmem_bytes = (
        2 * (tm_ * tk_ + tn_ * tk_) * in_isz      # double-buffered x & w tiles
        + 2 * tn_ * 4                             # bias tile (f32)
        + 2 * tm_ * tn_ * out_isz                 # double-buffered output tile
        + (0 if single_k else tm_ * tn_ * 4)      # f32 accumulator scratch
    )
    vmem_limit = int(min(max(2 * vmem_bytes, 16 << 20),
                         max(vmem_cap - (16 << 20), 32 << 20)))

    if single_k:
        out_p = pl.pallas_call(
            _linear_relu_kernel_single_k,
            out_shape=jax.ShapeDtypeStruct((Mp, Np), out_dtype),
            grid=(Mp // tm_, Np // tn_),
            in_specs=[
                pl.BlockSpec((tm_, tk_), lambda i, j: (i, 0)),  # x tile
                pl.BlockSpec((tn_, tk_), lambda i, j: (j, 0)),  # w tile (N,K)
                pl.BlockSpec((1, tn_), lambda i, j: (0, j)),    # bias tile
            ],
            out_specs=pl.BlockSpec((tm_, tn_), lambda i, j: (i, j)),
            compiler_params=pltpu.CompilerParams(
                dimension_semantics=("parallel", "parallel"),
                vmem_limit_bytes=vmem_limit,
            ),
        )(xc, wc, bc)
    else:
        out_p = pl.pallas_call(
            _linear_relu_kernel_acc,
            out_shape=jax.ShapeDtypeStruct((Mp, Np), out_dtype),
            grid=(Mp // tm_, Np // tn_, n_k),
            in_specs=[
                pl.BlockSpec((tm_, tk_), lambda i, j, k: (i, k)),  # x tile
                pl.BlockSpec((tn_, tk_), lambda i, j, k: (j, k)),  # w tile (N,K)
                pl.BlockSpec((1, tn_), lambda i, j, k: (0, j)),    # bias tile
            ],
            out_specs=pl.BlockSpec((tm_, tn_), lambda i, j, k: (i, j)),
            scratch_shapes=[pltpu.VMEM((tm_, tn_), jnp.float32)],
            compiler_params=pltpu.CompilerParams(
                dimension_semantics=("parallel", "parallel", "arbitrary"),
                vmem_limit_bytes=vmem_limit,
            ),
        )(xc, wc, bc)

    out = out_p
    if Mp != B or Np != N:
        out = out[:B, :N]
    if len(orig_shape) != 2:
        out = out.reshape(orig_shape[:-1] + (N,))
    return out


def _ref_linear_relu(x, w, b, compute_dtype=jnp.bfloat16):
    # Same bf16 operand cast + f32 accumulation the kernel uses (MXU numerics).
    acc = lax.dot_general(
        x.astype(compute_dtype), w.astype(compute_dtype),
        dimension_numbers=(((1,), (1,)), ((), ())),
        preferred_element_type=jnp.float32,
    )
    if b is not None:
        acc = acc + b.astype(jnp.float32)
    return jnp.maximum(acc, 0.0)


if __name__ == "__main__":
    # Small shapes consistent with the module: batch=8, dim_in=32, dim_hidden=32
    B, dim_in, dim_hidden = 8, 32, 32

    key = jax.random.PRNGKey(0)
    kx, kw, kb = jax.random.split(key, 3)

    x = jax.random.normal(kx, (B, dim_in), dtype=jnp.float32)
    # nn.Linear weight shape is [dim_hidden, dim_in].
    bound = 1.0 / (dim_in ** 0.5)
    w = jax.random.uniform(kw, (dim_hidden, dim_in), jnp.float32, -bound, bound)
    b = jax.random.uniform(kb, (dim_hidden,), jnp.float32, -bound, bound)

    y = jax.block_until_ready(linear_relu(x, w, b))
    y_ref = _ref_linear_relu(x, w, b)
    assert y.shape == (B, dim_hidden)
    assert jnp.allclose(y, y_ref, atol=1e-4, rtol=1e-4), "mismatch (fast path)"

    # Second check: odd sizes that exercise the K-accumulator path, non-128 N,
    # and the conditional padding logic.
    B2, D2, H2 = 40, 640, 96
    k2x, k2w, k2b = jax.random.split(jax.random.PRNGKey(0), 3)
    x2 = jax.random.normal(k2x, (B2, D2), dtype=jnp.float32)
    bound2 = 1.0 / (D2 ** 0.5)
    w2 = jax.random.uniform(k2w, (H2, D2), jnp.float32, -bound2, bound2)
    b2 = jax.random.uniform(k2b, (H2,), jnp.float32, -bound2, bound2)

    y2 = jax.block_until_ready(linear_relu(x2, w2, b2))
    y2_ref = _ref_linear_relu(x2, w2, b2)
    assert y2.shape == (B2, H2)
    assert jnp.allclose(y2, y2_ref, atol=1e-4, rtol=1e-4), "mismatch (acc path)"

    print("KERNEL_OK")
</pallas_src>

<mosaic_0001>
module attributes {stable_mosaic.version = 11 : i64} {
  func.func @_linear_relu_kernel_single_k(%arg0: i32, %arg1: i32, %arg2: memref<8x32xbf16, #tpu.memory_space<vmem>>, %arg3: memref<32x32xbf16, #tpu.memory_space<vmem>>, %arg4: memref<1x32xf32, #tpu.memory_space<vmem>>, %arg5: memref<8x32xf32, #tpu.memory_space<vmem>>) attributes {dimension_semantics = [#tpu.dimension_semantics<parallel>, #tpu.dimension_semantics<parallel>], iteration_bounds = array<i64: 1, 1>, scalar_prefetch = 0 : i64, scratch_operands = 0 : i64, tpu.core_type = #tpu.core_type<tc>, window_params = [{transform_indices = @transform_0, window_bounds = array<i64: 8, 32>}, {transform_indices = @transform_1, window_bounds = array<i64: 32, 32>}, {transform_indices = @transform_2, window_bounds = array<i64: 1, 32>}, {transform_indices = @transform_3, window_bounds = array<i64: 8, 32>}]} {
    %c0 = arith.constant 0 : index
    %c0_0 = arith.constant 0 : index
    %0 = vector.load %arg2[%c0, %c0_0] : memref<8x32xbf16, #tpu.memory_space<vmem>>, vector<8x32xbf16>
    %c0_1 = arith.constant 0 : index
    %c0_2 = arith.constant 0 : index
    %1 = vector.load %arg3[%c0_1, %c0_2] : memref<32x32xbf16, #tpu.memory_space<vmem>>, vector<32x32xbf16>
    %cst = arith.constant dense<0.000000e+00> : vector<8x32xf32>
    %2 = tpu.matmul %0, %1, %cst {dimension_numbers = #tpu.dot_dimension_numbers<[1], [1], [0], [0], [0, 0, 1, 0], [], []>} : vector<8x32xbf16>, vector<32x32xbf16>, vector<8x32xf32> -> vector<8x32xf32>
    %c0_3 = arith.constant 0 : index
    %c0_4 = arith.constant 0 : index
    %3 = vector.load %arg4[%c0_3, %c0_4] : memref<1x32xf32, #tpu.memory_space<vmem>>, vector<1x32xf32>
    %4 = vector.broadcast %3 : vector<1x32xf32> to vector<8x32xf32>
    %5 = arith.addf %2, %4 : vector<8x32xf32>
    %cst_5 = arith.constant 0.000000e+00 : f32
    %6 = vector.broadcast %cst_5 : f32 to vector<8x32xf32>
    %7 = arith.maximumf %5, %6 : vector<8x32xf32>
    %c0_6 = arith.constant 0 : index
    %c0_7 = arith.constant 0 : index
    %8 = vector.load %arg5[%c0_6, %c0_7] : memref<8x32xf32, #tpu.memory_space<vmem>>, vector<8x32xf32>
    tpu.vector_store %arg5[%c0_6, %c0_7], %7 {strides = array<i32>} : memref<8x32xf32, #tpu.memory_space<vmem>>, vector<8x32xf32>,
    return
  }
  func.func @transform_0(%arg0: i32, %arg1: i32) -> (i32, i32) {
    %c0_i32 = arith.constant 0 : i32
    %c0_i32_0 = arith.constant 0 : i32
    return %arg0, %c0_i32 : i32, i32
  }
  func.func @transform_1(%arg0: i32, %arg1: i32) -> (i32, i32) {
    %c0_i32 = arith.constant 0 : i32
    %c0_i32_0 = arith.constant 0 : i32
    return %arg1, %c0_i32 : i32, i32
  }
  func.func @transform_2(%arg0: i32, %arg1: i32) -> (i32, i32) {
    %c0_i32 = arith.constant 0 : i32
    %c0_i32_0 = arith.constant 0 : i32
    return %c0_i32, %arg1 : i32, i32
  }
  func.func @transform_3(%arg0: i32, %arg1: i32) -> (i32, i32) {
    %c0_i32 = arith.constant 0 : i32
    return %arg0, %arg1 : i32, i32
  }
}

</mosaic_0001>

<llo_original>
// kernel: tpu_custom_call.1
$region0: #{tpu_custom_call.1}
  #allocation0 [shape = 'u32[]', space=smem, size = 0x4, offset = 0x4, fixed_abs, tag = 'smem constant byte address 0x4 - core index']
  #allocation1 [shape = 'u32[72,128]{1,0:T(1,128)}', space=vmem, size = 0x9000, scoped, tag = 'internal scratch']
  %s0 = inlined_call_operand.hbm [shape: bf16[8,32], index: 0, kind: input, shape index: {}]
  %s1 = inlined_call_operand.hbm [shape: bf16[32,32], index: 1, kind: input, shape index: {}]
  %s2 = inlined_call_operand.vmem [shape: f32[1,32], index: 2, kind: input, shape index: {}]
  %s3 = inlined_call_operand.hbm [shape: f32[8,32], index: 3, kind: output, shape index: {}]
  %s4 = sld [smem:[#allocation0]]
  $region30: #{tpu_custom_call.1} parent=0
    _
  %s6 = ssub.s32 1, %s4
  %s7 = scalar_select 0, %s6, %s4
  $region1: #{tpu_custom_call.1} parent=0
    #allocation2 [shape = 'u8[2048]{0}', space=vmem, size = 0x800, scoped, tag = 'input window, operand 0, single buffered']
    #allocation3 [shape = 's32[1]{0}', space=sflag, size = 0x4, scoped, tag = 'scoped memory for tpu_custom_call.1']
    #allocation4 [shape = 's32[1]{0}', space=sflag, size = 0x4, scoped, tag = 'scoped memory for tpu_custom_call.1']
    #allocation5 [shape = 'u8[8192]{0}', space=vmem, size = 0x2000, scoped, tag = 'input window, operand 1, single buffered']
    #allocation6 [shape = 's32[1]{0}', space=sflag, size = 0x4, scoped, tag = 'scoped memory for tpu_custom_call.1']
    #allocation7 [shape = 'u8[4096]{0}', space=vmem, size = 0x1000, scoped, tag = 'output window, operand 0, single buffered']
    %8 = vsyncpa [#allocation3], 0
    %9 = vsyncpa [#allocation6], 0
    %10 = vsyncpa [#allocation4], 0
    // Predicated region
    $region2: #{tpu_custom_call.1} parent=1 // pred_check
      _
    $region3: #{tpu_custom_call.1} parent=1 // pred_check_branch
      %12 = sbr.rel (0) target = $region5
    $region4: #{tpu_custom_call.1} parent=1 // pred_region
      %14 = vsyncadd [#allocation3], 0
      %s16 = sshll.u32 %s0, 4
      %s17 = int_to_ptr.hbm [resolvable:$true] %s16
      %s18 = sshll.u32 [#allocation2], 4
      %s19 = int_to_ptr.vmem [resolvable:$true] %s18
      %21 = dma.hbm_to_vmem [thread:$0]  %s17, 64, %s19, [#allocation3]
    $region5: #{tpu_custom_call.1} parent=1 // pred_fallthru
      _
    // Predicated region
    $region6: #{tpu_custom_call.1} parent=1 // pred_check
      _
    $region7: #{tpu_custom_call.1} parent=1 // pred_check_branch
      %23 = sbr.rel (0) target = $region9
    $region8: #{tpu_custom_call.1} parent=1 // pred_region
      %25 = vsyncadd [#allocation6], 0
      %s26 = sshll.u32 %s1, 4
      %s27 = int_to_ptr.hbm [resolvable:$true] %s26
      %s28 = sshll.u32 [#allocation5], 4
      %s29 = int_to_ptr.vmem [resolvable:$true] %s28
      %34 = dma.hbm_to_vmem [thread:$0]  %s27, 256, %s29, [#allocation6], 64, 64, 4
    $region9: #{tpu_custom_call.1} parent=1 // pred_fallthru
      _
    // Predicated region
    $region10: #{tpu_custom_call.1} parent=1 // pred_check
      _
    $region11: #{tpu_custom_call.1} parent=1 // pred_check_branch
      %36 = sbr.rel (0) target = $region13
    $region12: #{tpu_custom_call.1} parent=1 // pred_region
      _
    $region13: #{tpu_custom_call.1} parent=1 // pred_fallthru
      _
    // Predicated region
    $region14: #{tpu_custom_call.1} parent=1 // pred_check
      _
    $region15: #{tpu_custom_call.1} parent=1 // pred_check_branch
      %38 = sbr.rel (0) target = $region17
    $region16: #{tpu_custom_call.1} parent=1 // pred_region
      %40 = dma.done [#allocation3], 64
    $region17: #{tpu_custom_call.1} parent=1 // pred_fallthru
      _
    // Predicated region
    $region18: #{tpu_custom_call.1} parent=1 // pred_check
      _
    $region19: #{tpu_custom_call.1} parent=1 // pred_check_branch
      %42 = sbr.rel (0) target = $region21
    $region20: #{tpu_custom_call.1} parent=1 // pred_region
      %44 = dma.done [#allocation6], 256
    $region21: #{tpu_custom_call.1} parent=1 // pred_fallthru
      _
    %v46 = vld [vmem:[#allocation2] sm:$0xf]
    %v47 = vld [vmem:[#allocation5] sm:$0xf]
    %v48 = vld [vmem:[#allocation5 + $0x4] sm:$0xf]
    %v49 = vld [vmem:[#allocation5 + $0x8] sm:$0xf]
    %v50 = vld [vmem:[#allocation5 + $0xc] sm:$0xf]
    %v51 = vld [vmem:[%s2] sm:$0x1]
    %v53 = vperm.slane %v51, 0
    %v59 = vunpack.c.l.b16 %v47
    %v60 = vunpack.c.l.b16 %v48
    %v61 = vunpack.c.l.b16 %v49
    %v62 = vunpack.c.l.b16 %v50
    %v63 = vpack.c.b16 %v60, %v59
    %v64 = vpack.c.b16 %v62, %v61
    %vm65 = vcmask 261120
    %v67 = vsel %vm65, %v46, 0
    %v70 = vsel %vm65, %v63, 0
    %v73 = vsel %vm65, %v64, 0
    %75 = vmatpush.bf16.xpose.msra.mxu0 0
    %76 = vmatpush.bf16.xpose.msra.mxu0 0
    %77 = vmatpush.bf16.xpose.msra.mxu0 0
    %78 = vmatpush.bf16.xpose.msra.mxu0 0
    %79 = vmatpush.bf16.xpose.msra.mxu0 0
    %80 = vmatpush.bf16.xpose.msra.mxu0 0
    %81 = vmatpush.bf16.xpose.msra.mxu0 %v73
    %82 = vmatpush.bf16.xpose.msra.mxu0 %v70
    %83 = vmatmul.bf16.gmra.mxu0 %v67
    %v84 = vpop.f32.mrf.mxu0
    %v85 = vadd.f32 %v53, %v84
    %v86 = vpop.f32.mrf.mxu0
    %87 = vdwg.mxu0
    %v88 = vmax.f32 %v85, 0.0
    %89 = vst.msk [vmem:[#allocation7] sm:$0xff] %vm65, %v88
    // Predicated region
    $region22: #{tpu_custom_call.1} parent=1 // pred_check
      _
    $region23: #{tpu_custom_call.1} parent=1 // pred_check_branch
      %91 = sbr.rel (0) target = $region25
    $region24: #{tpu_custom_call.1} parent=1 // pred_region
      %93 = vsyncadd [#allocation4], 0
      %s95 = sshll.u32 [#allocation7], 4
      %s96 = int_to_ptr.vmem [resolvable:$true] %s95
      %s97 = sshll.u32 %s3, 4
      %s98 = int_to_ptr.hbm [resolvable:$true] %s97
      %100 = dma.vmem_to_hbm [thread:$0]  %s96, 128, %s98, [#allocation4]
    $region25: #{tpu_custom_call.1} parent=1 // pred_fallthru
      _
    // Predicated region
    $region26: #{tpu_custom_call.1} parent=1 // pred_check
      _
    $region27: #{tpu_custom_call.1} parent=1 // pred_check_branch
      %102 = sbr.rel (0) target = $region29
    $region28: #{tpu_custom_call.1} parent=1 // pred_region
      %104 = dma.done [#allocation4], 128
    $region29: #{tpu_custom_call.1} parent=1 // pred_fallthru
      _
    %105 = vsyncpa [#allocation3], 1
    %106 = vsyncpa [#allocation6], 1
    %107 = vsyncpa [#allocation4], 1

</llo_original>
